<compile_context>
chip_gen: v7x
topology: tpu7x:2x2x1
jax: 0.10.0
libtpu: 0.0.40
codegen_flags: <defaults>
</compile_context>

<pallas_src>
import jax
import jax.numpy as jnp
from jax.experimental import pallas as pl
from jax.experimental.pallas import tpu as pltpu

FEATURE_SIZE = 290
# h_layer1/2/3 were undefined in the original snippet; picked lane/MXU-aligned
# sizes (multiples of 128) per the performance review.
H1, H2, H3 = 256, 128, 128
OUT_LAYER = 1

_LANE = 128
_DEFAULT_TILE_N = 512


def _round_up(n, m):
    return (n + m - 1) // m * m


def transnet_kernel(x_ref,
                    w1_ref, b1_ref,
                    w2_ref, b2_ref,
                    w3_ref, b3_ref,
                    w4t_ref, b4_ref,
                    o_ref):
    """One batch tile: x [TILE_N, F_PAD] -> o [1, TILE_N] (lane-dense output)."""
    cdt = x_ref.dtype  # compute dtype (f32 or bf16); accumulation always f32

    # Layer 1..3: Linear (BN + bias already folded into W/b) -> ReLU.
    # Dropout(p=0.1) is identity in eval mode.
    h = jnp.dot(x_ref[...], w1_ref[...], preferred_element_type=jnp.float32)
    h = jnp.maximum(h + b1_ref[...], 0.0).astype(cdt)

    h = jnp.dot(h, w2_ref[...], preferred_element_type=jnp.float32)
    h = jnp.maximum(h + b2_ref[...], 0.0).astype(cdt)

    h = jnp.dot(h, w3_ref[...], preferred_element_type=jnp.float32)
    h = jnp.maximum(h + b3_ref[...], 0.0).astype(cdt)

    # Final Linear(H3, 1): contract w4^T [1,H3] against h [TILE_N,H3] on their
    # last dims (q @ k^T pattern) so the result is lane-dense [1, TILE_N].
    out = jax.lax.dot_general(
        w4t_ref[...], h,
        dimension_numbers=(((1,), (1,)), ((), ())),
        preferred_element_type=jnp.float32)
    o_ref[...] = out + b4_ref[...]


def transnet_forward(x, params, *, tile_n=_DEFAULT_TILE_N, use_bf16=False):
    """x: [N, FEATURE_SIZE] float32; params: dict of weights / BN params."""
    N, F = x.shape
    assert F == FEATURE_SIZE
    eps = 1e-5
    f32 = jnp.float32

    # ---- plain-JAX glue: fold eval-mode BatchNorm + Linear bias into W / b ----
    def fold(w, b, g, be, m, v):
        scale = g / jnp.sqrt(v + eps)               # [H]
        shift = be - m * scale                      # [H]
        wf = (w * scale[None, :]).astype(f32)       # [F_in, H]
        bf = (b * scale + shift).reshape(1, -1).astype(f32)   # [1, H]
        return wf, bf

    w1f, b1f = fold(params["w1"], params["b1"], params["g1"], params["be1"],
                    params["m1"], params["v1"])
    w2f, b2f = fold(params["w2"], params["b2"], params["g2"], params["be2"],
                    params["m2"], params["v2"])
    w3f, b3f = fold(params["w3"], params["b3"], params["g3"], params["be3"],
                    params["m3"], params["v3"])
    w4t = params["w4"].T.astype(f32)                # [OUT_LAYER, H3] = [1, H3]
    b4 = params["b4"].reshape(1, 1).astype(f32)     # [1, 1]

    # ---- pad feature dim 290 -> 384 (3*128) and batch dim to a tile multiple ----
    f_pad = _round_up(FEATURE_SIZE, _LANE)
    tile_n = min(tile_n, _round_up(max(N, 1), _LANE))   # don't over-pad tiny batches
    n_pad = _round_up(N, tile_n)

    x_p = jnp.pad(x.astype(f32), ((0, n_pad - N), (0, f_pad - FEATURE_SIZE)))
    w1p = jnp.pad(w1f, ((0, f_pad - FEATURE_SIZE), (0, 0)))

    # Optional reduced-precision compute path (v6e/v7x); fp32 accumulate kept.
    cdt = jnp.bfloat16 if use_bf16 else f32
    x_p = x_p.astype(cdt)
    w1p = w1p.astype(cdt)
    w2c = w2f.astype(cdt)
    w3c = w3f.astype(cdt)
    w4c = w4t.astype(cdt)
    b1c = b1f.astype(cdt)
    b2c = b2f.astype(cdt)
    b3c = b3f.astype(cdt)
    b4c = b4.astype(cdt)

    grid = (n_pad // tile_n,)

    def resident(shape):
        # Constant index map -> fetched once, stays resident across grid steps.
        return pl.BlockSpec(shape, lambda i: (0, 0))

    in_specs = [
        pl.BlockSpec((tile_n, f_pad), lambda i: (i, 0)),   # pipelined x tiles
        resident(w1p.shape), resident(b1c.shape),
        resident(w2c.shape), resident(b2c.shape),
        resident(w3c.shape), resident(b3c.shape),
        resident(w4c.shape), resident(b4c.shape),
    ]
    out_specs = pl.BlockSpec((1, tile_n), lambda i: (0, i))

    out = pl.pallas_call(
        transnet_kernel,
        out_shape=jax.ShapeDtypeStruct((1, n_pad), jnp.float32),
        grid=grid,
        in_specs=in_specs,
        out_specs=out_specs,
        compiler_params=pltpu.CompilerParams(
            dimension_semantics=("parallel",),
        ),
    )(x_p, w1p, b1c, w2c, b2c, w3c, b3c, w4c, b4c)

    # Lane-dense [1, N_pad] slab -> [N, 1] (layout plumbing only).
    return out[0, :N].reshape(N, OUT_LAYER)


def init_params(key):
    """Deterministic synthetic parameters matching the module's shapes."""
    ks = jax.random.split(key, 8)

    def linear(kw, kb, fan_in, fan_out):
        bound = 1.0 / jnp.sqrt(fan_in)
        w = jax.random.uniform(kw, (fan_in, fan_out), jnp.float32, -bound, bound)
        b = jax.random.uniform(kb, (fan_out,), jnp.float32, -bound, bound)
        return w, b

    w1, b1 = linear(ks[0], ks[1], FEATURE_SIZE, H1)
    w2, b2 = linear(ks[2], ks[3], H1, H2)
    w3, b3 = linear(ks[4], ks[5], H2, H3)
    w4, b4 = linear(ks[6], ks[7], H3, OUT_LAYER)

    def bn(n, salt):
        # deterministic, non-trivial BN params / running stats
        g = 1.0 + 0.01 * jnp.arange(n, dtype=jnp.float32)
        be = 0.1 * jnp.sin(jnp.arange(n, dtype=jnp.float32) + salt)
        m = 0.05 * jnp.cos(jnp.arange(n, dtype=jnp.float32) + salt)
        v = 1.0 + 0.1 * jnp.abs(jnp.sin(jnp.arange(n, dtype=jnp.float32) * 0.5 + salt))
        return g, be, m, v

    g1, be1, m1, v1 = bn(H1, 0.0)
    g2, be2, m2, v2 = bn(H2, 1.0)
    g3, be3, m3, v3 = bn(H3, 2.0)

    return dict(w1=w1, b1=b1, w2=w2, b2=b2, w3=w3, b3=b3, w4=w4, b4=b4,
                g1=g1, be1=be1, m1=m1, v1=v1,
                g2=g2, be2=be2, m2=m2, v2=v2,
                g3=g3, be3=be3, m3=m3, v3=v3)


def reference_forward(x, params):
    """Pure-JAX reference of the eval-mode forward (unfused Linear->BN->ReLU)."""
    eps = 1e-5

    def layer(h, w, b, g, be, m, v):
        h = h @ w + b
        h = g * (h - m) / jnp.sqrt(v + eps) + be
        return jnp.maximum(h, 0.0)

    h = layer(x, params["w1"], params["b1"], params["g1"], params["be1"],
              params["m1"], params["v1"])
    h = layer(h, params["w2"], params["b2"], params["g2"], params["be2"],
              params["m2"], params["v2"])
    h = layer(h, params["w3"], params["b3"], params["g3"], params["be3"],
              params["m3"], params["v3"])
    return h @ params["w4"] + params["b4"]


if __name__ == "__main__":
    key = jax.random.PRNGKey(0)
    kx, kp = jax.random.split(key)

    N = 16
    x = jax.random.normal(kx, (N, FEATURE_SIZE), dtype=jnp.float32)
    params = init_params(kp)

    out = jax.block_until_ready(transnet_forward(x, params))
    ref = reference_forward(x, params)

    assert out.shape == (N, OUT_LAYER)
    # The kernel uses BN/bias-folded weights while the reference keeps BN
    # separate; with TPU's default f32 matmul precision (bf16 multiply passes)
    # the two round slightly differently, so compare at 1e-2 (outputs are O(1),
    # observed error is ~1e-3).
    assert jnp.allclose(out, ref, atol=1e-2, rtol=1e-2), "mismatch vs JAX reference"

    print("KERNEL_OK")
</pallas_src>

<mosaic_0001>
module attributes {stable_mosaic.version = 11 : i64} {
  func.func @transnet_kernel(%arg0: i32, %arg1: memref<128x384xf32, #tpu.memory_space<vmem>>, %arg2: memref<384x256xf32, #tpu.memory_space<vmem>>, %arg3: memref<1x256xf32, #tpu.memory_space<vmem>>, %arg4: memref<256x128xf32, #tpu.memory_space<vmem>>, %arg5: memref<1x128xf32, #tpu.memory_space<vmem>>, %arg6: memref<128x128xf32, #tpu.memory_space<vmem>>, %arg7: memref<1x128xf32, #tpu.memory_space<vmem>>, %arg8: memref<1x128xf32, #tpu.memory_space<vmem>>, %arg9: memref<1x1xf32, #tpu.memory_space<vmem>>, %arg10: memref<1x128xf32, #tpu.memory_space<vmem>>) attributes {dimension_semantics = [#tpu.dimension_semantics<parallel>], iteration_bounds = array<i64: 1>, scalar_prefetch = 0 : i64, scratch_operands = 0 : i64, tpu.core_type = #tpu.core_type<tc>, window_params = [{transform_indices = @transform_0, window_bounds = array<i64: 128, 384>}, {pipeline_mode = #tpu.pipeline_mode<synchronous>, transform_indices = @transform_1, window_bounds = array<i64: 384, 256>}, {pipeline_mode = #tpu.pipeline_mode<synchronous>, transform_indices = @transform_2, window_bounds = array<i64: 1, 256>}, {pipeline_mode = #tpu.pipeline_mode<synchronous>, transform_indices = @transform_3, window_bounds = array<i64: 256, 128>}, {pipeline_mode = #tpu.pipeline_mode<synchronous>, transform_indices = @transform_4, window_bounds = array<i64: 1, 128>}, {pipeline_mode = #tpu.pipeline_mode<synchronous>, transform_indices = @transform_5, window_bounds = array<i64: 128, 128>}, {pipeline_mode = #tpu.pipeline_mode<synchronous>, transform_indices = @transform_6, window_bounds = array<i64: 1, 128>}, {pipeline_mode = #tpu.pipeline_mode<synchronous>, transform_indices = @transform_7, window_bounds = array<i64: 1, 128>}, {pipeline_mode = #tpu.pipeline_mode<synchronous>, transform_indices = @transform_8, window_bounds = array<i64: 1, 1>}, {transform_indices = @transform_9, window_bounds = array<i64: 1, 128>}]} {
    %c0 = arith.constant 0 : index
    %c0_0 = arith.constant 0 : index
    %0 = vector.load %arg1[%c0, %c0_0] : memref<128x384xf32, #tpu.memory_space<vmem>>, vector<128x384xf32>
    %c0_1 = arith.constant 0 : index
    %c0_2 = arith.constant 0 : index
    %1 = vector.load %arg2[%c0_1, %c0_2] : memref<384x256xf32, #tpu.memory_space<vmem>>, vector<384x256xf32>
    %cst = arith.constant dense<0.000000e+00> : vector<128x256xf32>
    %2 = tpu.matmul %0, %1, %cst {dimension_numbers = #tpu.dot_dimension_numbers<[1], [0], [0], [1], [0, 0, 1, 1], [], []>} : vector<128x384xf32>, vector<384x256xf32>, vector<128x256xf32> -> vector<128x256xf32>
    %c0_3 = arith.constant 0 : index
    %c0_4 = arith.constant 0 : index
    %3 = vector.load %arg3[%c0_3, %c0_4] : memref<1x256xf32, #tpu.memory_space<vmem>>, vector<1x256xf32>
    %4 = vector.broadcast %3 : vector<1x256xf32> to vector<128x256xf32>
    %5 = arith.addf %2, %4 : vector<128x256xf32>
    %cst_5 = arith.constant 0.000000e+00 : f32
    %6 = vector.broadcast %cst_5 : f32 to vector<128x256xf32>
    %7 = arith.maximumf %5, %6 : vector<128x256xf32>
    %c0_6 = arith.constant 0 : index
    %c0_7 = arith.constant 0 : index
    %8 = vector.load %arg4[%c0_6, %c0_7] : memref<256x128xf32, #tpu.memory_space<vmem>>, vector<256x128xf32>
    %cst_8 = arith.constant dense<0.000000e+00> : vector<128x128xf32>
    %9 = tpu.matmul %7, %8, %cst_8 {dimension_numbers = #tpu.dot_dimension_numbers<[1], [0], [0], [1], [0, 0, 1, 1], [], []>} : vector<128x256xf32>, vector<256x128xf32>, vector<128x128xf32> -> vector<128x128xf32>
    %c0_9 = arith.constant 0 : index
    %c0_10 = arith.constant 0 : index
    %10 = vector.load %arg5[%c0_9, %c0_10] : memref<1x128xf32, #tpu.memory_space<vmem>>, vector<1x128xf32>
    %11 = vector.broadcast %10 : vector<1x128xf32> to vector<128x128xf32>
    %12 = arith.addf %9, %11 : vector<128x128xf32>
    %cst_11 = arith.constant 0.000000e+00 : f32
    %13 = vector.broadcast %cst_11 : f32 to vector<128x128xf32>
    %14 = arith.maximumf %12, %13 : vector<128x128xf32>
    %c0_12 = arith.constant 0 : index
    %c0_13 = arith.constant 0 : index
    %15 = vector.load %arg6[%c0_12, %c0_13] : memref<128x128xf32, #tpu.memory_space<vmem>>, vector<128x128xf32>
    %cst_14 = arith.constant dense<0.000000e+00> : vector<128x128xf32>
    %16 = tpu.matmul %14, %15, %cst_14 {dimension_numbers = #tpu.dot_dimension_numbers<[1], [0], [0], [1], [0, 0, 1, 1], [], []>} : vector<128x128xf32>, vector<128x128xf32>, vector<128x128xf32> -> vector<128x128xf32>
    %c0_15 = arith.constant 0 : index
    %c0_16 = arith.constant 0 : index
    %17 = vector.load %arg7[%c0_15, %c0_16] : memref<1x128xf32, #tpu.memory_space<vmem>>, vector<1x128xf32>
    %18 = vector.broadcast %17 : vector<1x128xf32> to vector<128x128xf32>
    %19 = arith.addf %16, %18 : vector<128x128xf32>
    %cst_17 = arith.constant 0.000000e+00 : f32
    %20 = vector.broadcast %cst_17 : f32 to vector<128x128xf32>
    %21 = arith.maximumf %19, %20 : vector<128x128xf32>
    %c0_18 = arith.constant 0 : index
    %c0_19 = arith.constant 0 : index
    %22 = vector.load %arg8[%c0_18, %c0_19] : memref<1x128xf32, #tpu.memory_space<vmem>>, vector<1x128xf32>
    %cst_20 = arith.constant dense<0.000000e+00> : vector<1x128xf32>
    %23 = tpu.matmul %22, %21, %cst_20 {dimension_numbers = #tpu.dot_dimension_numbers<[1], [1], [0], [0], [0, 0, 1, 0], [], []>} : vector<1x128xf32>, vector<128x128xf32>, vector<1x128xf32> -> vector<1x128xf32>
    %c0_21 = arith.constant 0 : index
    %c0_22 = arith.constant 0 : index
    %24 = vector.load %arg9[%c0_21, %c0_22] : memref<1x1xf32, #tpu.memory_space<vmem>>, vector<1x1xf32>
    %25 = vector.broadcast %24 : vector<1x1xf32> to vector<1x128xf32>
    %26 = arith.addf %23, %25 : vector<1x128xf32>
    %c0_23 = arith.constant 0 : index
    %c0_24 = arith.constant 0 : index
    %27 = vector.load %arg10[%c0_23, %c0_24] : memref<1x128xf32, #tpu.memory_space<vmem>>, vector<1x128xf32>
    tpu.vector_store %arg10[%c0_23, %c0_24], %26 {strides = array<i32>} : memref<1x128xf32, #tpu.memory_space<vmem>>, vector<1x128xf32>,
    return
  }
  func.func @transform_0(%arg0: i32) -> (i32, i32) {
    %c0_i32 = arith.constant 0 : i32
    %c0_i32_0 = arith.constant 0 : i32
    return %arg0, %c0_i32 : i32, i32
  }
  func.func @transform_1(%arg0: i32) -> (i32, i32) {
    %c0_i32 = arith.constant 0 : i32
    %c0_i32_0 = arith.constant 0 : i32
    %c0_i32_1 = arith.constant 0 : i32
    return %c0_i32, %c0_i32_0 : i32, i32
  }
  func.func @transform_2(%arg0: i32) -> (i32, i32) {
    %c0_i32 = arith.constant 0 : i32
    %c0_i32_0 = arith.constant 0 : i32
    %c0_i32_1 = arith.constant 0 : i32
    return %c0_i32, %c0_i32_0 : i32, i32
  }
  func.func @transform_3(%arg0: i32) -> (i32, i32) {
    %c0_i32 = arith.constant 0 : i32
    %c0_i32_0 = arith.constant 0 : i32
    %c0_i32_1 = arith.constant 0 : i32
    return %c0_i32, %c0_i32_0 : i32, i32
  }
  func.func @transform_4(%arg0: i32) -> (i32, i32) {
    %c0_i32 = arith.constant 0 : i32
    %c0_i32_0 = arith.constant 0 : i32
    %c0_i32_1 = arith.constant 0 : i32
    return %c0_i32, %c0_i32_0 : i32, i32
  }
  func.func @transform_5(%arg0: i32) -> (i32, i32) {
    %c0_i32 = arith.constant 0 : i32
    %c0_i32_0 = arith.constant 0 : i32
    %c0_i32_1 = arith.constant 0 : i32
    return %c0_i32, %c0_i32_0 : i32, i32
  }
  func.func @transform_6(%arg0: i32) -> (i32, i32) {
    %c0_i32 = arith.constant 0 : i32
    %c0_i32_0 = arith.constant 0 : i32
    %c0_i32_1 = arith.constant 0 : i32
    return %c0_i32, %c0_i32_0 : i32, i32
  }
  func.func @transform_7(%arg0: i32) -> (i32, i32) {
    %c0_i32 = arith.constant 0 : i32
    %c0_i32_0 = arith.constant 0 : i32
    %c0_i32_1 = arith.constant 0 : i32
    return %c0_i32, %c0_i32_0 : i32, i32
  }
  func.func @transform_8(%arg0: i32) -> (i32, i32) {
    %c0_i32 = arith.constant 0 : i32
    %c0_i32_0 = arith.constant 0 : i32
    %c0_i32_1 = arith.constant 0 : i32
    return %c0_i32, %c0_i32_0 : i32, i32
  }
  func.func @transform_9(%arg0: i32) -> (i32, i32) {
    %c0_i32 = arith.constant 0 : i32
    %c0_i32_0 = arith.constant 0 : i32
    return %c0_i32, %arg0 : i32, i32
  }
}

</mosaic_0001>

<llo_original>
// kernel: tpu_custom_call.1
$region0: #{tpu_custom_call.1}
  #allocation0 [shape = 'u32[]', space=smem, size = 0x4, offset = 0x4, fixed_abs, tag = 'smem constant byte address 0x4 - core index']
  #allocation1 [shape = 'u32[144,128]{1,0:T(1,128)}', space=vmem, size = 0x12000, scoped, tag = 'internal scratch']
  #allocation2 [shape = 'f32[1,1]{1,0:T(1,128)S(1)}', space=vmem, size = 0x200, scoped, tag = 'scoped memory for tpu_custom_call.1']
  %s0 = inlined_call_operand.hbm [shape: f32[128,384], index: 0, kind: input, shape index: {}]
  %s1 = inlined_call_operand.hbm [shape: f32[384,256], index: 1, kind: input, shape index: {}]
  %s2 = inlined_call_operand.vmem [shape: f32[1,256], index: 2, kind: input, shape index: {}]
  %s3 = inlined_call_operand.hbm [shape: f32[256,128], index: 3, kind: input, shape index: {}]
  %s4 = inlined_call_operand.vmem [shape: f32[1,128], index: 4, kind: input, shape index: {}]
  %s5 = inlined_call_operand.hbm [shape: f32[128,128], index: 5, kind: input, shape index: {}]
  %s6 = inlined_call_operand.vmem [shape: f32[1,128], index: 6, kind: input, shape index: {}]
  %s7 = inlined_call_operand.vmem [shape: f32[1,128], index: 7, kind: input, shape index: {}]
  %s8 = inlined_call_operand.<no memory space> [shape: f32[1,1], index: 8, kind: input, shape index: {}]
  %s9 = inlined_call_operand.hbm [shape: f32[1,128], index: 9, kind: output, shape index: {}]
  %s10 = sld [smem:[#allocation0]]
  $region62: #{tpu_custom_call.1} parent=0
    _
  %s12 = ssub.s32 1, %s10
  %s13 = scalar_select 0, %s12, %s10
  %v14 = vstv %s8
  %15 = vst [vmem:[#allocation2] sm:$0x1] %v14
  $region1: #{tpu_custom_call.1} parent=0
    #allocation3 [shape = 'u8[196608]{0}', space=vmem, size = 0x30000, scoped, tag = 'input window, operand 0, single buffered']
    #allocation4 [shape = 's32[1]{0}', space=sflag, size = 0x4, scoped, tag = 'scoped memory for tpu_custom_call.1']
    #allocation5 [shape = 's32[1]{0}', space=sflag, size = 0x4, scoped, tag = 'scoped memory for tpu_custom_call.1']
    #allocation6 [shape = 'u8[393216]{0}', space=vmem, size = 0x60000, scoped, tag = 'input window, operand 1, single buffered']
    #allocation7 [shape = 's32[1]{0}', space=sflag, size = 0x4, scoped, tag = 'scoped memory for tpu_custom_call.1']
    #allocation8 [shape = 'u8[131072]{0}', space=vmem, size = 0x20000, scoped, tag = 'input window, operand 3, single buffered']
    #allocation9 [shape = 'u8[65536]{0}', space=vmem, size = 0x10000, scoped, tag = 'input window, operand 5, single buffered']
    #allocation10 [shape = 's32[1]{0}', space=sflag, size = 0x4, scoped, tag = 'scoped memory for tpu_custom_call.1']
    #allocation11 [shape = 'u8[512]{0}', space=vmem, size = 0x400, scoped, tag = 'output window, operand 0, single buffered']
    %16 = vsyncpa [#allocation4], 0
    %17 = vsyncpa [#allocation7], 0
    %18 = vsyncpa [#allocation10], 0
    %19 = vsyncpa [#allocation5], 0
    // Predicated region
    $region2: #{tpu_custom_call.1} parent=1 // pred_check
      _
    $region3: #{tpu_custom_call.1} parent=1 // pred_check_branch
      %21 = sbr.rel (0) target = $region5
    $region4: #{tpu_custom_call.1} parent=1 // pred_region
      %s23 = ssub.s32 6144, 6144
      %24 = vsyncadd [#allocation4], %s23
      %s25 = sshll.u32 [#allocation3], 4
      %s26 = int_to_ptr.vmem [resolvable:$true] %s25
      %31 = dma.hbm_to_vmem [thread:$0]  %s0, 6144, %s26, [#allocation4], 384, 384, 24
    $region5: #{tpu_custom_call.1} parent=1 // pred_fallthru
      _
    // Predicated region
    $region6: #{tpu_custom_call.1} parent=1 // pred_check
      _
    $region7: #{tpu_custom_call.1} parent=1 // pred_check_branch
      %33 = sbr.rel (0) target = $region9
    $region8: #{tpu_custom_call.1} parent=1 // pred_region
      %s35 = ssub.s32 12288, 12288
      %36 = vsyncadd [#allocation7], %s35
      %s37 = sshll.u32 [#allocation6], 4
      %s38 = int_to_ptr.vmem [resolvable:$true] %s37
      %43 = dma.hbm_to_vmem [thread:$0]  %s1, 12288, %s38, [#allocation7], 256, 256, 16
    $region9: #{tpu_custom_call.1} parent=1 // pred_fallthru
      _
    // Predicated region
    $region10: #{tpu_custom_call.1} parent=1 // pred_check
      _
    $region11: #{tpu_custom_call.1} parent=1 // pred_check_branch
      %45 = sbr.rel (0) target = $region13
    $region12: #{tpu_custom_call.1} parent=1 // pred_region
      _
    $region13: #{tpu_custom_call.1} parent=1 // pred_fallthru
      _
    // Predicated region
    $region14: #{tpu_custom_call.1} parent=1 // pred_check
      _
    $region15: #{tpu_custom_call.1} parent=1 // pred_check_branch
      %47 = sbr.rel (0) target = $region17
    $region16: #{tpu_custom_call.1} parent=1 // pred_region
      %s49 = ssub.s32 4096, 4096
      %50 = vsyncadd [#allocation7], %s49
      %s51 = sshll.u32 [#allocation8], 4
      %s52 = int_to_ptr.vmem [resolvable:$true] %s51
      %57 = dma.hbm_to_vmem [thread:$0]  %s3, 4096, %s52, [#allocation7], 128, 128, 8
    $region17: #{tpu_custom_call.1} parent=1 // pred_fallthru
      _
    // Predicated region
    $region18: #{tpu_custom_call.1} parent=1 // pred_check
      _
    $region19: #{tpu_custom_call.1} parent=1 // pred_check_branch
      %59 = sbr.rel (0) target = $region21
    $region20: #{tpu_custom_call.1} parent=1 // pred_region
      _
    $region21: #{tpu_custom_call.1} parent=1 // pred_fallthru
      _
    // Predicated region
    $region22: #{tpu_custom_call.1} parent=1 // pred_check
      _
    $region23: #{tpu_custom_call.1} parent=1 // pred_check_branch
      %61 = sbr.rel (0) target = $region25
    $region24: #{tpu_custom_call.1} parent=1 // pred_region
      %s63 = ssub.s32 2048, 2048
      %64 = vsyncadd [#allocation10], %s63
      %s65 = sshll.u32 [#allocation9], 4
      %s66 = int_to_ptr.vmem [resolvable:$true] %s65
      %71 = dma.hbm_to_vmem [thread:$0]  %s5, 2048, %s66, [#allocation10], 128, 128, 8
    $region25: #{tpu_custom_call.1} parent=1 // pred_fallthru
      _
    // Predicated region
    $region26: #{tpu_custom_call.1} parent=1 // pred_check
      _
    $region27: #{tpu_custom_call.1} parent=1 // pred_check_branch
      %73 = sbr.rel (0) target = $region29
    $region28: #{tpu_custom_call.1} parent=1 // pred_region
      _
    $region29: #{tpu_custom_call.1} parent=1 // pred_fallthru
      _
    // Predicated region
    $region30: #{tpu_custom_call.1} parent=1 // pred_check
      _
    $region31: #{tpu_custom_call.1} parent=1 // pred_check_branch
      %75 = sbr.rel (0) target = $region33
    $region32: #{tpu_custom_call.1} parent=1 // pred_region
      _
    $region33: #{tpu_custom_call.1} parent=1 // pred_fallthru
      _
    // Predicated region
    $region34: #{tpu_custom_call.1} parent=1 // pred_check
      _
    $region35: #{tpu_custom_call.1} parent=1 // pred_check_branch
      %77 = sbr.rel (0) target = $region37
    $region36: #{tpu_custom_call.1} parent=1 // pred_region
      _
    $region37: #{tpu_custom_call.1} parent=1 // pred_fallthru
      _
    // Predicated region
    $region38: #{tpu_custom_call.1} parent=1 // pred_check
      _
    $region39: #{tpu_custom_call.1} parent=1 // pred_check_branch
      %79 = sbr.rel (0) target = $region41
    $region40: #{tpu_custom_call.1} parent=1 // pred_region
      %80 = dma.done [#allocation4], 6144
    $region41: #{tpu_custom_call.1} parent=1 // pred_fallthru
      _
    // Predicated region
    $region42: #{tpu_custom_call.1} parent=1 // pred_check
      _
    $region43: #{tpu_custom_call.1} parent=1 // pred_check_branch
      %82 = sbr.rel (0) target = $region45
    $region44: #{tpu_custom_call.1} parent=1 // pred_region
      %83 = dma.done [#allocation7], 12288
    $region45: #{tpu_custom_call.1} parent=1 // pred_fallthru
      _
    // Predicated region
    $region46: #{tpu_custom_call.1} parent=1 // pred_check
      _
    $region47: #{tpu_custom_call.1} parent=1 // pred_check_branch
      %85 = sbr.rel (0) target = $region49
    $region48: #{tpu_custom_call.1} parent=1 // pred_region
      %86 = dma.done [#allocation7], 4096
    $region49: #{tpu_custom_call.1} parent=1 // pred_fallthru
      _
    // Predicated region
    $region50: #{tpu_custom_call.1} parent=1 // pred_check
      _
    $region51: #{tpu_custom_call.1} parent=1 // pred_check_branch
      %88 = sbr.rel (0) target = $region53
    $region52: #{tpu_custom_call.1} parent=1 // pred_region
      %89 = dma.done [#allocation10], 2048
    $region53: #{tpu_custom_call.1} parent=1 // pred_fallthru
      _
    %v90 = vld [vmem:[#allocation3] sm:$0xff]
    %v91 = vld [vmem:[#allocation3 + $0x8] sm:$0xff]
    %v92 = vld [vmem:[#allocation3 + $0x10] sm:$0xff]
    %v93 = vld [vmem:[#allocation3 + $0x18] sm:$0xff]
    %v94 = vld [vmem:[#allocation3 + $0x20] sm:$0xff]
    %v95 = vld [vmem:[#allocation3 + $0x28] sm:$0xff]
    %v96 = vld [vmem:[#allocation3 + $0x30] sm:$0xff]
    %v97 = vld [vmem:[#allocation3 + $0x38] sm:$0xff]
    %v98 = vld [vmem:[#allocation3 + $0x40] sm:$0xff]
    %v99 = vld [vmem:[#allocation3 + $0x48] sm:$0xff]
    %v100 = vld [vmem:[#allocation3 + $0x50] sm:$0xff]
    %v101 = vld [vmem:[#allocation3 + $0x58] sm:$0xff]
    %v102 = vld [vmem:[#allocation3 + $0x60] sm:$0xff]
    %v103 = vld [vmem:[#allocation3 + $0x68] sm:$0xff]
    %v104 = vld [vmem:[#allocation3 + $0x70] sm:$0xff]
    %v105 = vld [vmem:[#allocation3 + $0x78] sm:$0xff]
    %v106 = vld [vmem:[#allocation3 + $0x80] sm:$0xff]
    %v107 = vld [vmem:[#allocation3 + $0x88] sm:$0xff]
    %v108 = vld [vmem:[#allocation3 + $0x90] sm:$0xff]
    %v109 = vld [vmem:[#allocation3 + $0x98] sm:$0xff]
    %v110 = vld [vmem:[#allocation3 + $0xa0] sm:$0xff]
    %v111 = vld [vmem:[#allocation3 + $0xa8] sm:$0xff]
    %v112 = vld [vmem:[#allocation3 + $0xb0] sm:$0xff]
    %v113 = vld [vmem:[#allocation3 + $0xb8] sm:$0xff]
    %v114 = vld [vmem:[#allocation3 + $0xc0] sm:$0xff]
    %v115 = vld [vmem:[#allocation3 + $0xc8] sm:$0xff]
    %v116 = vld [vmem:[#allocation3 + $0xd0] sm:$0xff]
    %v117 = vld [vmem:[#allocation3 + $0xd8] sm:$0xff]
    %v118 = vld [vmem:[#allocation3 + $0xe0] sm:$0xff]
    %v119 = vld [vmem:[#allocation3 + $0xe8] sm:$0xff]
    %v120 = vld [vmem:[#allocation3 + $0xf0] sm:$0xff]
    %v121 = vld [vmem:[#allocation3 + $0xf8] sm:$0xff]
    %v122 = vld [vmem:[#allocation3 + $0x100] sm:$0xff]
    %v123 = vld [vmem:[#allocation3 + $0x108] sm:$0xff]
    %v124 = vld [vmem:[#allocation3 + $0x110] sm:$0xff]
    %v125 = vld [vmem:[#allocation3 + $0x118] sm:$0xff]
    %v126 = vld [vmem:[#allocation3 + $0x120] sm:$0xff]
    %v127 = vld [vmem:[#allocation3 + $0x128] sm:$0xff]
    %v128 = vld [vmem:[#allocation3 + $0x130] sm:$0xff]
    %v129 = vld [vmem:[#allocation3 + $0x138] sm:$0xff]
    %v130 = vld [vmem:[#allocation3 + $0x140] sm:$0xff]
    %v131 = vld [vmem:[#allocation3 + $0x148] sm:$0xff]
    %v132 = vld [vmem:[#allocation3 + $0x150] sm:$0xff]
    %v133 = vld [vmem:[#allocation3 + $0x158] sm:$0xff]
    %v134 = vld [vmem:[#allocation3 + $0x160] sm:$0xff]
    %v135 = vld [vmem:[#allocation3 + $0x168] sm:$0xff]
    %v136 = vld [vmem:[#allocation3 + $0x170] sm:$0xff]
    %v137 = vld [vmem:[#allocation3 + $0x178] sm:$0xff]
    %v138 = vld [vmem:[#allocation6] sm:$0xff]
    %v139 = vld [vmem:[#allocation6 + $0x8] sm:$0xff]
    %v140 = vld [vmem:[#allocation6 + $0x10] sm:$0xff]
    %v141 = vld [vmem:[#allocation6 + $0x18] sm:$0xff]
    %v142 = vld [vmem:[#allocation6 + $0x20] sm:$0xff]
    %v143 = vld [vmem:[#allocation6 + $0x28] sm:$0xff]
    %v144 = vld [vmem:[#allocation6 + $0x30] sm:$0xff]
    %v145 = vld [vmem:[#allocation6 + $0x38] sm:$0xff]
    %v146 = vld [vmem:[#allocation6 + $0x40] sm:$0xff]
    %v147 = vld [vmem:[#allocation6 + $0x48] sm:$0xff]
    %v148 = vld [vmem:[#allocation6 + $0x50] sm:$0xff]
    %v149 = vld [vmem:[#allocation6 + $0x58] sm:$0xff]
    %v150 = vld [vmem:[#allocation6 + $0x60] sm:$0xff]
    %v151 = vld [vmem:[#allocation6 + $0x68] sm:$0xff]
    %v152 = vld [vmem:[#allocation6 + $0x70] sm:$0xff]
    %v153 = vld [vmem:[#allocation6 + $0x78] sm:$0xff]
    %v154 = vld [vmem:[#allocation6 + $0x80] sm:$0xff]
    %v155 = vld [vmem:[#allocation6 + $0x88] sm:$0xff]
    %v156 = vld [vmem:[#allocation6 + $0x90] sm:$0xff]
    %v157 = vld [vmem:[#allocation6 + $0x98] sm:$0xff]
    %v158 = vld [vmem:[#allocation6 + $0xa0] sm:$0xff]
    %v159 = vld [vmem:[#allocation6 + $0xa8] sm:$0xff]
    %v160 = vld [vmem:[#allocation6 + $0xb0] sm:$0xff]
    %v161 = vld [vmem:[#allocation6 + $0xb8] sm:$0xff]
    %v162 = vld [vmem:[#allocation6 + $0xc0] sm:$0xff]
    %v163 = vld [vmem:[#allocation6 + $0xc8] sm:$0xff]
    %v164 = vld [vmem:[#allocation6 + $0xd0] sm:$0xff]
    %v165 = vld [vmem:[#allocation6 + $0xd8] sm:$0xff]
    %v166 = vld [vmem:[#allocation6 + $0xe0] sm:$0xff]
    %v167 = vld [vmem:[#allocation6 + $0xe8] sm:$0xff]
    %v168 = vld [vmem:[#allocation6 + $0xf0] sm:$0xff]
    %v169 = vld [vmem:[#allocation6 + $0xf8] sm:$0xff]
    %v170 = vld [vmem:[#allocation6 + $0x100] sm:$0xff]
    %v171 = vld [vmem:[#allocation6 + $0x108] sm:$0xff]
    %v172 = vld [vmem:[#allocation6 + $0x110] sm:$0xff]
    %v173 = vld [vmem:[#allocation6 + $0x118] sm:$0xff]
    %v174 = vld [vmem:[#allocation6 + $0x120] sm:$0xff]
    %v175 = vld [vmem:[#allocation6 + $0x128] sm:$0xff]
    %v176 = vld [vmem:[#allocation6 + $0x130] sm:$0xff]
    %v177 = vld [vmem:[#allocation6 + $0x138] sm:$0xff]
    %v178 = vld [vmem:[#allocation6 + $0x140] sm:$0xff]
    %v179 = vld [vmem:[#allocation6 + $0x148] sm:$0xff]
    %v180 = vld [vmem:[#allocation6 + $0x150] sm:$0xff]
    %v181 = vld [vmem:[#allocation6 + $0x158] sm:$0xff]
    %v182 = vld [vmem:[#allocation6 + $0x160] sm:$0xff]
    %v183 = vld [vmem:[#allocation6 + $0x168] sm:$0xff]
    %v184 = vld [vmem:[#allocation6 + $0x170] sm:$0xff]
    %v185 = vld [vmem:[#allocation6 + $0x178] sm:$0xff]
    %v186 = vld [vmem:[#allocation6 + $0x180] sm:$0xff]
    %v187 = vld [vmem:[#allocation6 + $0x188] sm:$0xff]
    %v188 = vld [vmem:[#allocation6 + $0x190] sm:$0xff]
    %v189 = vld [vmem:[#allocation6 + $0x198] sm:$0xff]
    %v190 = vld [vmem:[#allocation6 + $0x1a0] sm:$0xff]
    %v191 = vld [vmem:[#allocation6 + $0x1a8] sm:$0xff]
    %v192 = vld [vmem:[#allocation6 + $0x1b0] sm:$0xff]
    %v193 = vld [vmem:[#allocation6 + $0x1b8] sm:$0xff]
    %v194 = vld [vmem:[#allocation6 + $0x1c0] sm:$0xff]
    %v195 = vld [vmem:[#allocation6 + $0x1c8] sm:$0xff]
    %v196 = vld [vmem:[#allocation6 + $0x1d0] sm:$0xff]
    %v197 = vld [vmem:[#allocation6 + $0x1d8] sm:$0xff]
    %v198 = vld [vmem:[#allocation6 + $0x1e0] sm:$0xff]
    %v199 = vld [vmem:[#allocation6 + $0x1e8] sm:$0xff]
    %v200 = vld [vmem:[#allocation6 + $0x1f0] sm:$0xff]
    %v201 = vld [vmem:[#allocation6 + $0x1f8] sm:$0xff]
    %v202 = vld [vmem:[#allocation6 + $0x200] sm:$0xff]
    %v203 = vld [vmem:[#allocation6 + $0x208] sm:$0xff]
    %v204 = vld [vmem:[#allocation6 + $0x210] sm:$0xff]
    %v205 = vld [vmem:[#allocation6 + $0x218] sm:$0xff]
    %v206 = vld [vmem:[#allocation6 + $0x220] sm:$0xff]
    %v207 = vld [vmem:[#allocation6 + $0x228] sm:$0xff]
    %v208 = vld [vmem:[#allocation6 + $0x230] sm:$0xff]
    %v209 = vld [vmem:[#allocation6 + $0x238] sm:$0xff]
    %v210 = vld [vmem:[#allocation6 + $0x240] sm:$0xff]
    %v211 = vld [vmem:[#allocation6 + $0x248] sm:$0xff]
    %v212 = vld [vmem:[#allocation6 + $0x250] sm:$0xff]
    %v213 = vld [vmem:[#allocation6 + $0x258] sm:$0xff]
    %v214 = vld [vmem:[#allocation6 + $0x260] sm:$0xff]
    %v215 = vld [vmem:[#allocation6 + $0x268] sm:$0xff]
    %v216 = vld [vmem:[#allocation6 + $0x270] sm:$0xff]
    %v217 = vld [vmem:[#allocation6 + $0x278] sm:$0xff]
    %v218 = vld [vmem:[#allocation6 + $0x280] sm:$0xff]
    %v219 = vld [vmem:[#allocation6 + $0x288] sm:$0xff]
    %v220 = vld [vmem:[#allocation6 + $0x290] sm:$0xff]
    %v221 = vld [vmem:[#allocation6 + $0x298] sm:$0xff]
    %v222 = vld [vmem:[#allocation6 + $0x2a0] sm:$0xff]
    %v223 = vld [vmem:[#allocation6 + $0x2a8] sm:$0xff]
    %v224 = vld [vmem:[#allocation6 + $0x2b0] sm:$0xff]
    %v225 = vld [vmem:[#allocation6 + $0x2b8] sm:$0xff]
    %v226 = vld [vmem:[#allocation6 + $0x2c0] sm:$0xff]
    %v227 = vld [vmem:[#allocation6 + $0x2c8] sm:$0xff]
    %v228 = vld [vmem:[#allocation6 + $0x2d0] sm:$0xff]
    %v229 = vld [vmem:[#allocation6 + $0x2d8] sm:$0xff]
    %v230 = vld [vmem:[#allocation6 + $0x2e0] sm:$0xff]
    %v231 = vld [vmem:[#allocation6 + $0x2e8] sm:$0xff]
    %v232 = vld [vmem:[#allocation6 + $0x2f0] sm:$0xff]
    %v233 = vld [vmem:[#allocation6 + $0x2f8] sm:$0xff]
    %v234 = vld [vmem:[%s2] sm:$0x3]
    %v236 = vlaneseq
    %v237 = vshrl.u32 %v236, 7
    %v238 = vsub.s32 0, %v237
    %v239 = vrot.slane %v234, %v238
    %v240 = vlaneseq
    %v241 = vshrl.u32 %v240, 7
    %v242 = vsub.s32 1, %v241
    %v243 = vrot.slane %v234, %v242
    %246 = vmatprep.subr.mxu0 %v139
    %247 = vmatpush1.msra.mxu0 %v138
    %248 = vmatprep.subr.mxu0 %v141
    %249 = vmatpush1.msra.mxu0 %v140
    %250 = vmatprep.subr.mxu0 %v143
    %251 = vmatpush1.msra.mxu0 %v142
    %252 = vmatprep.subr.mxu0 %v145
    %253 = vmatpush1.msra.mxu0 %v144
    %254 = vmatprep.subr.mxu0 %v147
    %255 = vmatpush1.msra.mxu0 %v146
    %256 = vmatprep.subr.mxu0 %v149
    %257 = vmatpush1.msra.mxu0 %v148
    %258 = vmatprep.subr.mxu0 %v151
    %259 = vmatpush1.msra.mxu0 %v150
    %260 = vmatprep.subr.mxu0 %v153
    %261 = vmatpush1.msra.mxu0 %v152
    %262 = vmatprep.subr.mxu0 %v155
    %263 = vmatpush1.msra.mxu0 %v154
    %264 = vmatprep.subr.mxu0 %v157
    %265 = vmatpush1.msra.mxu0 %v156
    %266 = vmatprep.subr.mxu0 %v159
    %267 = vmatpush1.msra.mxu0 %v158
    %268 = vmatprep.subr.mxu0 %v161
    %269 = vmatpush1.msra.mxu0 %v160
    %270 = vmatprep.subr.mxu0 %v163
    %271 = vmatpush1.msra.mxu0 %v162
    %272 = vmatprep.subr.mxu0 %v165
    %273 = vmatpush1.msra.mxu0 %v164
    %274 = vmatprep.subr.mxu0 %v167
    %275 = vmatpush1.msra.mxu0 %v166
    %276 = vmatprep.subr.mxu0 %v169
    %277 = vmatpush1.msra.mxu0 %v168
    %278 = vmatprep.subr.mxu0 %v171
    %279 = vmatpush1.msra.mxu0 %v170
    %280 = vmatprep.subr.mxu0 %v173
    %281 = vmatpush1.msra.mxu0 %v172
    %282 = vmatprep.subr.mxu0 %v175
    %283 = vmatpush1.msra.mxu0 %v174
    %284 = vmatprep.subr.mxu0 %v177
    %285 = vmatpush1.msra.mxu0 %v176
    %286 = vmatprep.subr.mxu0 %v179
    %287 = vmatpush1.msra.mxu0 %v178
    %288 = vmatprep.subr.mxu0 %v181
    %289 = vmatpush1.msra.mxu0 %v180
    %290 = vmatprep.subr.mxu0 %v183
    %291 = vmatpush1.msra.mxu0 %v182
    %292 = vmatprep.subr.mxu0 %v185
    %293 = vmatpush1.msra.mxu0 %v184
    %294 = vmatprep.subr.mxu0 %v187
    %295 = vmatpush1.msra.mxu0 %v186
    %296 = vmatprep.subr.mxu0 %v189
    %297 = vmatpush1.msra.mxu0 %v188
    %298 = vmatprep.subr.mxu0 %v191
    %299 = vmatpush1.msra.mxu0 %v190
    %300 = vmatprep.subr.mxu0 %v193
    %301 = vmatpush1.msra.mxu0 %v192
    %302 = vmatprep.subr.mxu0 %v195
    %303 = vmatpush1.msra.mxu0 %v194
    %304 = vmatprep.subr.mxu0 %v197
    %305 = vmatpush1.msra.mxu0 %v196
    %306 = vmatprep.subr.mxu0 %v199
    %307 = vmatpush1.msra.mxu0 %v198
    %308 = vmatprep.subr.mxu0 %v201
    %309 = vmatpush1.msra.mxu0 %v200
    %310 = vmatprep.mubr.f32.mxu0 %v91
    %311 = vmatmul.mubr.f32.gmra.mrb[0].mxu0 %v90
    %v312 = vpop.f32.mrb[0].mxu0
    %v313 = vadd.f32 %v239, %v312
    %v314 = vpop.f32.mrb[0].mxu0
    %v315 = vadd.f32 %v243, %v314
    %316 = vmatprep.mubr.f32.mxu0 %v94
    %317 = vmatmul.mubr.f32.gmra.mrb[0].mxu0 %v93
    %v318 = vpop.f32.mrb[0].mxu0
    %v319 = vadd.f32 %v239, %v318
    %v320 = vpop.f32.mrb[0].mxu0
    %v321 = vadd.f32 %v243, %v320
    %322 = vmatprep.mubr.f32.mxu0 %v97
    %323 = vmatmul.mubr.f32.gmra.mrb[0].mxu0 %v96
    %v324 = vpop.f32.mrb[0].mxu0
    %v325 = vadd.f32 %v239, %v324
    %v326 = vpop.f32.mrb[0].mxu0
    %v327 = vadd.f32 %v243, %v326
    %328 = vmatprep.mubr.f32.mxu0 %v100
    %329 = vmatmul.mubr.f32.gmra.mrb[0].mxu0 %v99
    %v330 = vpop.f32.mrb[0].mxu0
    %v331 = vadd.f32 %v239, %v330
    %v332 = vpop.f32.mrb[0].mxu0
    %v333 = vadd.f32 %v243, %v332
    %334 = vmatprep.mubr.f32.mxu0 %v103
    %335 = vmatmul.mubr.f32.gmra.mrb[0].mxu0 %v102
    %v336 = vpop.f32.mrb[0].mxu0
    %v337 = vadd.f32 %v239, %v336
    %v338 = vpop.f32.mrb[0].mxu0
    %v339 = vadd.f32 %v243, %v338
    %340 = vmatprep.mubr.f32.mxu0 %v106
    %341 = vmatmul.mubr.f32.gmra.mrb[0].mxu0 %v105
    %v342 = vpop.f32.mrb[0].mxu0
    %v343 = vadd.f32 %v239, %v342
    %v344 = vpop.f32.mrb[0].mxu0
    %v345 = vadd.f32 %v243, %v344
    %346 = vmatprep.mubr.f32.mxu0 %v109
    %347 = vmatmul.mubr.f32.gmra.mrb[0].mxu0 %v108
    %v348 = vpop.f32.mrb[0].mxu0
    %v349 = vadd.f32 %v239, %v348
    %v350 = vpop.f32.mrb[0].mxu0
    %v351 = vadd.f32 %v243, %v350
    %352 = vmatprep.mubr.f32.mxu0 %v112
    %353 = vmatmul.mubr.f32.gmra.mrb[0].mxu0 %v111
    %v354 = vpop.f32.mrb[0].mxu0
    %v355 = vadd.f32 %v239, %v354
    %v356 = vpop.f32.mrb[0].mxu0
    %v357 = vadd.f32 %v243, %v356
    %358 = vmatprep.mubr.f32.mxu0 %v115
    %359 = vmatmul.mubr.f32.gmra.mrb[0].mxu0 %v114
    %v360 = vpop.f32.mrb[0].mxu0
    %v361 = vadd.f32 %v239, %v360
    %v362 = vpop.f32.mrb[0].mxu0
    %v363 = vadd.f32 %v243, %v362
    %364 = vmatprep.mubr.f32.mxu0 %v118
    %365 = vmatmul.mubr.f32.gmra.mrb[0].mxu0 %v117
    %v366 = vpop.f32.mrb[0].mxu0
    %v367 = vadd.f32 %v239, %v366
    %v368 = vpop.f32.mrb[0].mxu0
    %v369 = vadd.f32 %v243, %v368
    %370 = vmatprep.mubr.f32.mxu0 %v121
    %371 = vmatmul.mubr.f32.gmra.mrb[0].mxu0 %v120
    %v372 = vpop.f32.mrb[0].mxu0
    %v373 = vadd.f32 %v239, %v372
    %v374 = vpop.f32.mrb[0].mxu0
    %v375 = vadd.f32 %v243, %v374
    %376 = vmatprep.mubr.f32.mxu0 %v124
    %377 = vmatmul.mubr.f32.gmra.mrb[0].mxu0 %v123
    %v378 = vpop.f32.mrb[0].mxu0
    %v379 = vadd.f32 %v239, %v378
    %v380 = vpop.f32.mrb[0].mxu0
    %v381 = vadd.f32 %v243, %v380
    %382 = vmatprep.mubr.f32.mxu0 %v127
    %383 = vmatmul.mubr.f32.gmra.mrb[0].mxu0 %v126
    %v384 = vpop.f32.mrb[0].mxu0
    %v385 = vadd.f32 %v239, %v384
    %v386 = vpop.f32.mrb[0].mxu0
    %v387 = vadd.f32 %v243, %v386
    %388 = vmatprep.mubr.f32.mxu0 %v130
    %389 = vmatmul.mubr.f32.gmra.mrb[0].mxu0 %v129
    %v390 = vpop.f32.mrb[0].mxu0
    %v391 = vadd.f32 %v239, %v390
    %v392 = vpop.f32.mrb[0].mxu0
    %v393 = vadd.f32 %v243, %v392
    %394 = vmatprep.mubr.f32.mxu0 %v133
    %395 = vmatmul.mubr.f32.gmra.mrb[0].mxu0 %v132
    %v396 = vpop.f32.mrb[0].mxu0
    %v397 = vadd.f32 %v239, %v396
    %v398 = vpop.f32.mrb[0].mxu0
    %v399 = vadd.f32 %v243, %v398
    %400 = vmatprep.mubr.f32.mxu0 %v136
    %401 = vmatmul.mubr.f32.gmra.mrb[0].mxu0 %v135
    %v402 = vpop.f32.mrb[0].mxu0
    %v403 = vadd.f32 %v239, %v402
    %v404 = vpop.f32.mrb[0].mxu0
    %v405 = vadd.f32 %v243, %v404
    %406 = vdwg.mxu0
    %407 = vmatprep.subr.mxu0 %v203
    %408 = vmatpush1.msra.mxu0 %v202
    %409 = vmatprep.subr.mxu0 %v205
    %410 = vmatpush1.msra.mxu0 %v204
    %411 = vmatprep.subr.mxu0 %v207
    %412 = vmatpush1.msra.mxu0 %v206
    %413 = vmatprep.subr.mxu0 %v209
    %414 = vmatpush1.msra.mxu0 %v208
    %415 = vmatprep.subr.mxu0 %v211
    %416 = vmatpush1.msra.mxu0 %v210
    %417 = vmatprep.subr.mxu0 %v213
    %418 = vmatpush1.msra.mxu0 %v212
    %419 = vmatprep.subr.mxu0 %v215
    %420 = vmatpush1.msra.mxu0 %v214
    %421 = vmatprep.subr.mxu0 %v217
    %422 = vmatpush1.msra.mxu0 %v216
    %423 = vmatprep.subr.mxu0 %v219
    %424 = vmatpush1.msra.mxu0 %v218
    %425 = vmatprep.subr.mxu0 %v221
    %426 = vmatpush1.msra.mxu0 %v220
    %427 = vmatprep.subr.mxu0 %v223
    %428 = vmatpush1.msra.mxu0 %v222
    %429 = vmatprep.subr.mxu0 %v225
    %430 = vmatpush1.msra.mxu0 %v224
    %431 = vmatprep.subr.mxu0 %v227
    %432 = vmatpush1.msra.mxu0 %v226
    %433 = vmatprep.subr.mxu0 %v229
    %434 = vmatpush1.msra.mxu0 %v228
    %435 = vmatprep.subr.mxu0 %v231
    %436 = vmatpush1.msra.mxu0 %v230
    %437 = vmatprep.subr.mxu0 %v233
    %438 = vmatpush1.msra.mxu0 %v232
    %439 = vmatprep.subr.mxu0 0.0
    %440 = vmatpush1.msra.mxu0 0.0
    %441 = vmatprep.subr.mxu0 0.0
    %442 = vmatpush1.msra.mxu0 0.0
    %443 = vmatprep.subr.mxu0 0.0
    %444 = vmatpush1.msra.mxu0 0.0
    %445 = vmatprep.subr.mxu0 0.0
    %446 = vmatpush1.msra.mxu0 0.0
    %447 = vmatprep.subr.mxu0 0.0
    %448 = vmatpush1.msra.mxu0 0.0
    %449 = vmatprep.subr.mxu0 0.0
    %450 = vmatpush1.msra.mxu0 0.0
    %451 = vmatprep.subr.mxu0 0.0
    %452 = vmatpush1.msra.mxu0 0.0
    %453 = vmatprep.subr.mxu0 0.0
    %454 = vmatpush1.msra.mxu0 0.0
    %455 = vmatprep.subr.mxu0 0.0
    %456 = vmatpush1.msra.mxu0 0.0
    %457 = vmatprep.subr.mxu0 0.0
    %458 = vmatpush1.msra.mxu0 0.0
    %459 = vmatprep.subr.mxu0 0.0
    %460 = vmatpush1.msra.mxu0 0.0
    %461 = vmatprep.subr.mxu0 0.0
    %462 = vmatpush1.msra.mxu0 0.0
    %463 = vmatprep.subr.mxu0 0.0
    %464 = vmatpush1.msra.mxu0 0.0
    %465 = vmatprep.subr.mxu0 0.0
    %466 = vmatpush1.msra.mxu0 0.0
    %467 = vmatprep.subr.mxu0 0.0
    %468 = vmatpush1.msra.mxu0 0.0
    %469 = vmatprep.subr.mxu0 0.0
    %470 = vmatpush1.msra.mxu0 0.0
    %471 = vmatprep.mubr.f32.mxu0 0.0
    %472 = vmatmul.mubr.f32.gmra.mrb[0].mxu0 %v92
    %v473 = vpop.f32.mrb[0].mxu0
    %v474 = vadd.f32 %v313, %v473
    %v475 = vpop.f32.mrb[0].mxu0
    %v476 = vadd.f32 %v315, %v475
    %477 = vmatprep.mubr.f32.mxu0 0.0
    %478 = vmatmul.mubr.f32.gmra.mrb[0].mxu0 %v95
    %v479 = vpop.f32.mrb[0].mxu0
    %v480 = vadd.f32 %v319, %v479
    %v481 = vpop.f32.mrb[0].mxu0
    %v482 = vadd.f32 %v321, %v481
    %483 = vmatprep.mubr.f32.mxu0 0.0
    %484 = vmatmul.mubr.f32.gmra.mrb[0].mxu0 %v98
    %v485 = vpop.f32.mrb[0].mxu0
    %v486 = vadd.f32 %v325, %v485
    %v487 = vpop.f32.mrb[0].mxu0
    %v488 = vadd.f32 %v327, %v487
    %489 = vmatprep.mubr.f32.mxu0 0.0
    %490 = vmatmul.mubr.f32.gmra.mrb[0].mxu0 %v101
    %v491 = vpop.f32.mrb[0].mxu0
    %v492 = vadd.f32 %v331, %v491
    %v493 = vpop.f32.mrb[0].mxu0
    %v494 = vadd.f32 %v333, %v493
    %495 = vmatprep.mubr.f32.mxu0 0.0
    %496 = vmatmul.mubr.f32.gmra.mrb[0].mxu0 %v104
    %v497 = vpop.f32.mrb[0].mxu0
    %v498 = vadd.f32 %v337, %v497
    %v499 = vpop.f32.mrb[0].mxu0
    %v500 = vadd.f32 %v339, %v499
    %501 = vmatprep.mubr.f32.mxu0 0.0
    %502 = vmatmul.mubr.f32.gmra.mrb[0].mxu0 %v107
    %v503 = vpop.f32.mrb[0].mxu0
    %v504 = vadd.f32 %v343, %v503
    %v505 = vpop.f32.mrb[0].mxu0
    %v506 = vadd.f32 %v345, %v505
    %507 = vmatprep.mubr.f32.mxu0 0.0
    %508 = vmatmul.mubr.f32.gmra.mrb[0].mxu0 %v110
    %v509 = vpop.f32.mrb[0].mxu0
    %v510 = vadd.f32 %v349, %v509
    %v511 = vpop.f32.mrb[0].mxu0
    %v512 = vadd.f32 %v351, %v511
    %513 = vmatprep.mubr.f32.mxu0 0.0
    %514 = vmatmul.mubr.f32.gmra.mrb[0].mxu0 %v113
    %v515 = vpop.f32.mrb[0].mxu0
    %v516 = vadd.f32 %v355, %v515
    %v517 = vpop.f32.mrb[0].mxu0
    %v518 = vadd.f32 %v357, %v517
    %519 = vmatprep.mubr.f32.mxu0 0.0
    %520 = vmatmul.mubr.f32.gmra.mrb[0].mxu0 %v116
    %v521 = vpop.f32.mrb[0].mxu0
    %v522 = vadd.f32 %v361, %v521
    %v523 = vpop.f32.mrb[0].mxu0
    %v524 = vadd.f32 %v363, %v523
    %525 = vmatprep.mubr.f32.mxu0 0.0
    %526 = vmatmul.mubr.f32.gmra.mrb[0].mxu0 %v119
    %v527 = vpop.f32.mrb[0].mxu0
    %v528 = vadd.f32 %v367, %v527
    %v529 = vpop.f32.mrb[0].mxu0
    %v530 = vadd.f32 %v369, %v529
    %531 = vmatprep.mubr.f32.mxu0 0.0
    %532 = vmatmul.mubr.f32.gmra.mrb[0].mxu0 %v122
    %v533 = vpop.f32.mrb[0].mxu0
    %v534 = vadd.f32 %v373, %v533
    %v535 = vpop.f32.mrb[0].mxu0
    %v536 = vadd.f32 %v375, %v535
    %537 = vmatprep.mubr.f32.mxu0 0.0
    %538 = vmatmul.mubr.f32.gmra.mrb[0].mxu0 %v125
    %v539 = vpop.f32.mrb[0].mxu0
    %v540 = vadd.f32 %v379, %v539
    %v541 = vpop.f32.mrb[0].mxu0
    %v542 = vadd.f32 %v381, %v541
    %543 = vmatprep.mubr.f32.mxu0 0.0
    %544 = vmatmul.mubr.f32.gmra.mrb[0].mxu0 %v128
    %v545 = vpop.f32.mrb[0].mxu0
    %v546 = vadd.f32 %v385, %v545
    %v547 = vpop.f32.mrb[0].mxu0
    %v548 = vadd.f32 %v387, %v547
    %549 = vmatprep.mubr.f32.mxu0 0.0
    %550 = vmatmul.mubr.f32.gmra.mrb[0].mxu0 %v131
    %v551 = vpop.f32.mrb[0].mxu0
    %v552 = vadd.f32 %v391, %v551
    %v553 = vpop.f32.mrb[0].mxu0
    %v554 = vadd.f32 %v393, %v553
    %555 = vmatprep.mubr.f32.mxu0 0.0
    %556 = vmatmul.mubr.f32.gmra.mrb[0].mxu0 %v134
    %v557 = vpop.f32.mrb[0].mxu0
    %v558 = vadd.f32 %v397, %v557
    %v559 = vpop.f32.mrb[0].mxu0
    %v560 = vadd.f32 %v399, %v559
    %561 = vmatprep.mubr.f32.mxu0 0.0
    %562 = vmatmul.mubr.f32.gmra.mrb[0].mxu0 %v137
    %v563 = vpop.f32.mrb[0].mxu0
    %v564 = vadd.f32 %v403, %v563
    %v565 = vpop.f32.mrb[0].mxu0
    %v566 = vadd.f32 %v405, %v565
    %567 = vdwg.mxu0
    %v568 = vmax.f32 %v474, 0.0
    %v569 = vmax.f32 %v476, 0.0
    %v570 = vmax.f32 %v480, 0.0
    %v571 = vmax.f32 %v482, 0.0
    %v572 = vmax.f32 %v486, 0.0
    %v573 = vmax.f32 %v488, 0.0
    %v574 = vmax.f32 %v492, 0.0
    %v575 = vmax.f32 %v494, 0.0
    %v576 = vmax.f32 %v498, 0.0
    %v577 = vmax.f32 %v500, 0.0
    %v578 = vmax.f32 %v504, 0.0
    %v579 = vmax.f32 %v506, 0.0
    %v580 = vmax.f32 %v510, 0.0
    %v581 = vmax.f32 %v512, 0.0
    %v582 = vmax.f32 %v516, 0.0
    %v583 = vmax.f32 %v518, 0.0
    %v584 = vmax.f32 %v522, 0.0
    %v585 = vmax.f32 %v524, 0.0
    %v586 = vmax.f32 %v528, 0.0
    %v587 = vmax.f32 %v530, 0.0
    %v588 = vmax.f32 %v534, 0.0
    %v589 = vmax.f32 %v536, 0.0
    %v590 = vmax.f32 %v540, 0.0
    %v591 = vmax.f32 %v542, 0.0
    %v592 = vmax.f32 %v546, 0.0
    %v593 = vmax.f32 %v548, 0.0
    %v594 = vmax.f32 %v552, 0.0
    %v595 = vmax.f32 %v554, 0.0
    %v596 = vmax.f32 %v558, 0.0
    %v597 = vmax.f32 %v560, 0.0
    %v598 = vmax.f32 %v564, 0.0
    %v599 = vmax.f32 %v566, 0.0
    %v600 = vld [vmem:[#allocation8] sm:$0xff]
    %v601 = vld [vmem:[#allocation8 + $0x8] sm:$0xff]
    %v602 = vld [vmem:[#allocation8 + $0x10] sm:$0xff]
    %v603 = vld [vmem:[#allocation8 + $0x18] sm:$0xff]
    %v604 = vld [vmem:[#allocation8 + $0x20] sm:$0xff]
    %v605 = vld [vmem:[#allocation8 + $0x28] sm:$0xff]
    %v606 = vld [vmem:[#allocation8 + $0x30] sm:$0xff]
    %v607 = vld [vmem:[#allocation8 + $0x38] sm:$0xff]
    %v608 = vld [vmem:[#allocation8 + $0x40] sm:$0xff]
    %v609 = vld [vmem:[#allocation8 + $0x48] sm:$0xff]
    %v610 = vld [vmem:[#allocation8 + $0x50] sm:$0xff]
    %v611 = vld [vmem:[#allocation8 + $0x58] sm:$0xff]
    %v612 = vld [vmem:[#allocation8 + $0x60] sm:$0xff]
    %v613 = vld [vmem:[#allocation8 + $0x68] sm:$0xff]
    %v614 = vld [vmem:[#allocation8 + $0x70] sm:$0xff]
    %v615 = vld [vmem:[#allocation8 + $0x78] sm:$0xff]
    %v616 = vld [vmem:[#allocation8 + $0x80] sm:$0xff]
    %v617 = vld [vmem:[#allocation8 + $0x88] sm:$0xff]
    %v618 = vld [vmem:[#allocation8 + $0x90] sm:$0xff]
    %v619 = vld [vmem:[#allocation8 + $0x98] sm:$0xff]
    %v620 = vld [vmem:[#allocation8 + $0xa0] sm:$0xff]
    %v621 = vld [vmem:[#allocation8 + $0xa8] sm:$0xff]
    %v622 = vld [vmem:[#allocation8 + $0xb0] sm:$0xff]
    %v623 = vld [vmem:[#allocation8 + $0xb8] sm:$0xff]
    %v624 = vld [vmem:[#allocation8 + $0xc0] sm:$0xff]
    %v625 = vld [vmem:[#allocation8 + $0xc8] sm:$0xff]
    %v626 = vld [vmem:[#allocation8 + $0xd0] sm:$0xff]
    %v627 = vld [vmem:[#allocation8 + $0xd8] sm:$0xff]
    %v628 = vld [vmem:[#allocation8 + $0xe0] sm:$0xff]
    %v629 = vld [vmem:[#allocation8 + $0xe8] sm:$0xff]
    %v630 = vld [vmem:[#allocation8 + $0xf0] sm:$0xff]
    %v631 = vld [vmem:[#allocation8 + $0xf8] sm:$0xff]
    %v632 = vld [vmem:[%s4] sm:$0x1]
    %v634 = vlaneseq
    %v635 = vshrl.u32 %v634, 7
    %v636 = vsub.s32 0, %v635
    %v637 = vrot.slane %v632, %v636
    %639 = vmatprep.subr.mxu0 0.0
    %640 = vmatpush1.msra.mxu0 %v600
    %641 = vmatprep.subr.mxu0 0.0
    %642 = vmatpush1.msra.mxu0 %v601
    %643 = vmatprep.subr.mxu0 0.0
    %644 = vmatpush1.msra.mxu0 %v602
    %645 = vmatprep.subr.mxu0 0.0
    %646 = vmatpush1.msra.mxu0 %v603
    %647 = vmatprep.subr.mxu0 0.0
    %648 = vmatpush1.msra.mxu0 %v604
    %649 = vmatprep.subr.mxu0 0.0
    %650 = vmatpush1.msra.mxu0 %v605
    %651 = vmatprep.subr.mxu0 0.0
    %652 = vmatpush1.msra.mxu0 %v606
    %653 = vmatprep.subr.mxu0 0.0
    %654 = vmatpush1.msra.mxu0 %v607
    %655 = vmatprep.subr.mxu0 0.0
    %656 = vmatpush1.msra.mxu0 %v608
    %657 = vmatprep.subr.mxu0 0.0
    %658 = vmatpush1.msra.mxu0 %v609
    %659 = vmatprep.subr.mxu0 0.0
    %660 = vmatpush1.msra.mxu0 %v610
    %661 = vmatprep.subr.mxu0 0.0
    %662 = vmatpush1.msra.mxu0 %v611
    %663 = vmatprep.subr.mxu0 0.0
    %664 = vmatpush1.msra.mxu0 %v612
    %665 = vmatprep.subr.mxu0 0.0
    %666 = vmatpush1.msra.mxu0 %v613
    %667 = vmatprep.subr.mxu0 0.0
    %668 = vmatpush1.msra.mxu0 %v614
    %669 = vmatprep.subr.mxu0 0.0
    %670 = vmatpush1.msra.mxu0 %v615
    %671 = vmatprep.subr.mxu0 0.0
    %672 = vmatpush1.msra.mxu0 %v616
    %673 = vmatprep.subr.mxu0 0.0
    %674 = vmatpush1.msra.mxu0 %v617
    %675 = vmatprep.subr.mxu0 0.0
    %676 = vmatpush1.msra.mxu0 %v618
    %677 = vmatprep.subr.mxu0 0.0
    %678 = vmatpush1.msra.mxu0 %v619
    %679 = vmatprep.subr.mxu0 0.0
    %680 = vmatpush1.msra.mxu0 %v620
    %681 = vmatprep.subr.mxu0 0.0
    %682 = vmatpush1.msra.mxu0 %v621
    %683 = vmatprep.subr.mxu0 0.0
    %684 = vmatpush1.msra.mxu0 %v622
    %685 = vmatprep.subr.mxu0 0.0
    %686 = vmatpush1.msra.mxu0 %v623
    %687 = vmatprep.subr.mxu0 0.0
    %688 = vmatpush1.msra.mxu0 %v624
    %689 = vmatprep.subr.mxu0 0.0
    %690 = vmatpush1.msra.mxu0 %v625
    %691 = vmatprep.subr.mxu0 0.0
    %692 = vmatpush1.msra.mxu0 %v626
    %693 = vmatprep.subr.mxu0 0.0
    %694 = vmatpush1.msra.mxu0 %v627
    %695 = vmatprep.subr.mxu0 0.0
    %696 = vmatpush1.msra.mxu0 %v628
    %697 = vmatprep.subr.mxu0 0.0
    %698 = vmatpush1.msra.mxu0 %v629
    %699 = vmatprep.subr.mxu0 0.0
    %700 = vmatpush1.msra.mxu0 %v630
    %701 = vmatprep.subr.mxu0 0.0
    %702 = vmatpush1.msra.mxu0 %v631
    %703 = vmatprep.mubr.f32.mxu0 %v569
    %704 = vmatmul.mubr.f32.gmra.mrb[0].mxu0 %v568
    %v705 = vpop.f32.mrb[0].mxu0
    %v706 = vadd.f32 %v637, %v705
    %v707 = vpop.f32.mrb[0].mxu0
    %708 = vmatprep.mubr.f32.mxu0 %v571
    %709 = vmatmul.mubr.f32.gmra.mrb[0].mxu0 %v570
    %v710 = vpop.f32.mrb[0].mxu0
    %v711 = vadd.f32 %v637, %v710
    %v712 = vpop.f32.mrb[0].mxu0
    %713 = vmatprep.mubr.f32.mxu0 %v573
    %714 = vmatmul.mubr.f32.gmra.mrb[0].mxu0 %v572
    %v715 = vpop.f32.mrb[0].mxu0
    %v716 = vadd.f32 %v637, %v715
    %v717 = vpop.f32.mrb[0].mxu0
    %718 = vmatprep.mubr.f32.mxu0 %v575
    %719 = vmatmul.mubr.f32.gmra.mrb[0].mxu0 %v574
    %v720 = vpop.f32.mrb[0].mxu0
    %v721 = vadd.f32 %v637, %v720
    %v722 = vpop.f32.mrb[0].mxu0
    %723 = vmatprep.mubr.f32.mxu0 %v577
    %724 = vmatmul.mubr.f32.gmra.mrb[0].mxu0 %v576
    %v725 = vpop.f32.mrb[0].mxu0
    %v726 = vadd.f32 %v637, %v725
    %v727 = vpop.f32.mrb[0].mxu0
    %728 = vmatprep.mubr.f32.mxu0 %v579
    %729 = vmatmul.mubr.f32.gmra.mrb[0].mxu0 %v578
    %v730 = vpop.f32.mrb[0].mxu0
    %v731 = vadd.f32 %v637, %v730
    %v732 = vpop.f32.mrb[0].mxu0
    %733 = vmatprep.mubr.f32.mxu0 %v581
    %734 = vmatmul.mubr.f32.gmra.mrb[0].mxu0 %v580
    %v735 = vpop.f32.mrb[0].mxu0
    %v736 = vadd.f32 %v637, %v735
    %v737 = vpop.f32.mrb[0].mxu0
    %738 = vmatprep.mubr.f32.mxu0 %v583
    %739 = vmatmul.mubr.f32.gmra.mrb[0].mxu0 %v582
    %v740 = vpop.f32.mrb[0].mxu0
    %v741 = vadd.f32 %v637, %v740
    %v742 = vpop.f32.mrb[0].mxu0
    %743 = vmatprep.mubr.f32.mxu0 %v585
    %744 = vmatmul.mubr.f32.gmra.mrb[0].mxu0 %v584
    %v745 = vpop.f32.mrb[0].mxu0
    %v746 = vadd.f32 %v637, %v745
    %v747 = vpop.f32.mrb[0].mxu0
    %748 = vmatprep.mubr.f32.mxu0 %v587
    %749 = vmatmul.mubr.f32.gmra.mrb[0].mxu0 %v586
    %v750 = vpop.f32.mrb[0].mxu0
    %v751 = vadd.f32 %v637, %v750
    %v752 = vpop.f32.mrb[0].mxu0
    %753 = vmatprep.mubr.f32.mxu0 %v589
    %754 = vmatmul.mubr.f32.gmra.mrb[0].mxu0 %v588
    %v755 = vpop.f32.mrb[0].mxu0
    %v756 = vadd.f32 %v637, %v755
    %v757 = vpop.f32.mrb[0].mxu0
    %758 = vmatprep.mubr.f32.mxu0 %v591
    %759 = vmatmul.mubr.f32.gmra.mrb[0].mxu0 %v590
    %v760 = vpop.f32.mrb[0].mxu0
    %v761 = vadd.f32 %v637, %v760
    %v762 = vpop.f32.mrb[0].mxu0
    %763 = vmatprep.mubr.f32.mxu0 %v593
    %764 = vmatmul.mubr.f32.gmra.mrb[0].mxu0 %v592
    %v765 = vpop.f32.mrb[0].mxu0
    %v766 = vadd.f32 %v637, %v765
    %v767 = vpop.f32.mrb[0].mxu0
    %768 = vmatprep.mubr.f32.mxu0 %v595
    %769 = vmatmul.mubr.f32.gmra.mrb[0].mxu0 %v594
    %v770 = vpop.f32.mrb[0].mxu0
    %v771 = vadd.f32 %v637, %v770
    %v772 = vpop.f32.mrb[0].mxu0
    %773 = vmatprep.mubr.f32.mxu0 %v597
    %774 = vmatmul.mubr.f32.gmra.mrb[0].mxu0 %v596
    %v775 = vpop.f32.mrb[0].mxu0
    %v776 = vadd.f32 %v637, %v775
    %v777 = vpop.f32.mrb[0].mxu0
    %778 = vmatprep.mubr.f32.mxu0 %v599
    %779 = vmatmul.mubr.f32.gmra.mrb[0].mxu0 %v598
    %v780 = vpop.f32.mrb[0].mxu0
    %v781 = vadd.f32 %v637, %v780
    %v782 = vpop.f32.mrb[0].mxu0
    %783 = vdwg.mxu0
    %v784 = vmax.f32 %v706, 0.0
    %v785 = vmax.f32 %v711, 0.0
    %v786 = vmax.f32 %v716, 0.0
    %v787 = vmax.f32 %v721, 0.0
    %v788 = vmax.f32 %v726, 0.0
    %v789 = vmax.f32 %v731, 0.0
    %v790 = vmax.f32 %v736, 0.0
    %v791 = vmax.f32 %v741, 0.0
    %v792 = vmax.f32 %v746, 0.0
    %v793 = vmax.f32 %v751, 0.0
    %v794 = vmax.f32 %v756, 0.0
    %v795 = vmax.f32 %v761, 0.0
    %v796 = vmax.f32 %v766, 0.0
    %v797 = vmax.f32 %v771, 0.0
    %v798 = vmax.f32 %v776, 0.0
    %v799 = vmax.f32 %v781, 0.0
    %v800 = vld [vmem:[#allocation9] sm:$0xff]
    %v801 = vld [vmem:[#allocation9 + $0x8] sm:$0xff]
    %v802 = vld [vmem:[#allocation9 + $0x10] sm:$0xff]
    %v803 = vld [vmem:[#allocation9 + $0x18] sm:$0xff]
    %v804 = vld [vmem:[#allocation9 + $0x20] sm:$0xff]
    %v805 = vld [vmem:[#allocation9 + $0x28] sm:$0xff]
    %v806 = vld [vmem:[#allocation9 + $0x30] sm:$0xff]
    %v807 = vld [vmem:[#allocation9 + $0x38] sm:$0xff]
    %v808 = vld [vmem:[#allocation9 + $0x40] sm:$0xff]
    %v809 = vld [vmem:[#allocation9 + $0x48] sm:$0xff]
    %v810 = vld [vmem:[#allocation9 + $0x50] sm:$0xff]
    %v811 = vld [vmem:[#allocation9 + $0x58] sm:$0xff]
    %v812 = vld [vmem:[#allocation9 + $0x60] sm:$0xff]
    %v813 = vld [vmem:[#allocation9 + $0x68] sm:$0xff]
    %v814 = vld [vmem:[#allocation9 + $0x70] sm:$0xff]
    %v815 = vld [vmem:[#allocation9 + $0x78] sm:$0xff]
    %v816 = vld [vmem:[%s6] sm:$0x1]
    %v818 = vlaneseq
    %v819 = vshrl.u32 %v818, 7
    %v820 = vsub.s32 0, %v819
    %v821 = vrot.slane %v816, %v820
    %823 = vmatprep.subr.mxu0 0.0
    %824 = vmatpush1.msra.mxu0 %v800
    %825 = vmatprep.subr.mxu0 0.0
    %826 = vmatpush1.msra.mxu0 %v801
    %827 = vmatprep.subr.mxu0 0.0
    %828 = vmatpush1.msra.mxu0 %v802
    %829 = vmatprep.subr.mxu0 0.0
    %830 = vmatpush1.msra.mxu0 %v803
    %831 = vmatprep.subr.mxu0 0.0
    %832 = vmatpush1.msra.mxu0 %v804
    %833 = vmatprep.subr.mxu0 0.0
    %834 = vmatpush1.msra.mxu0 %v805
    %835 = vmatprep.subr.mxu0 0.0
    %836 = vmatpush1.msra.mxu0 %v806
    %837 = vmatprep.subr.mxu0 0.0
    %838 = vmatpush1.msra.mxu0 %v807
    %839 = vmatprep.subr.mxu0 0.0
    %840 = vmatpush1.msra.mxu0 %v808
    %841 = vmatprep.subr.mxu0 0.0
    %842 = vmatpush1.msra.mxu0 %v809
    %843 = vmatprep.subr.mxu0 0.0
    %844 = vmatpush1.msra.mxu0 %v810
    %845 = vmatprep.subr.mxu0 0.0
    %846 = vmatpush1.msra.mxu0 %v811
    %847 = vmatprep.subr.mxu0 0.0
    %848 = vmatpush1.msra.mxu0 %v812
    %849 = vmatprep.subr.mxu0 0.0
    %850 = vmatpush1.msra.mxu0 %v813
    %851 = vmatprep.subr.mxu0 0.0
    %852 = vmatpush1.msra.mxu0 %v814
    %853 = vmatprep.subr.mxu0 0.0
    %854 = vmatpush1.msra.mxu0 %v815
    %855 = vmatprep.subr.mxu0 0.0
    %856 = vmatpush1.msra.mxu0 0.0
    %857 = vmatprep.subr.mxu0 0.0
    %858 = vmatpush1.msra.mxu0 0.0
    %859 = vmatprep.subr.mxu0 0.0
    %860 = vmatpush1.msra.mxu0 0.0
    %861 = vmatprep.subr.mxu0 0.0
    %862 = vmatpush1.msra.mxu0 0.0
    %863 = vmatprep.subr.mxu0 0.0
    %864 = vmatpush1.msra.mxu0 0.0
    %865 = vmatprep.subr.mxu0 0.0
    %866 = vmatpush1.msra.mxu0 0.0
    %867 = vmatprep.subr.mxu0 0.0
    %868 = vmatpush1.msra.mxu0 0.0
    %869 = vmatprep.subr.mxu0 0.0
    %870 = vmatpush1.msra.mxu0 0.0
    %871 = vmatprep.subr.mxu0 0.0
    %872 = vmatpush1.msra.mxu0 0.0
    %873 = vmatprep.subr.mxu0 0.0
    %874 = vmatpush1.msra.mxu0 0.0
    %875 = vmatprep.subr.mxu0 0.0
    %876 = vmatpush1.msra.mxu0 0.0
    %877 = vmatprep.subr.mxu0 0.0
    %878 = vmatpush1.msra.mxu0 0.0
    %879 = vmatprep.subr.mxu0 0.0
    %880 = vmatpush1.msra.mxu0 0.0
    %881 = vmatprep.subr.mxu0 0.0
    %882 = vmatpush1.msra.mxu0 0.0
    %883 = vmatprep.subr.mxu0 0.0
    %884 = vmatpush1.msra.mxu0 0.0
    %885 = vmatprep.subr.mxu0 0.0
    %886 = vmatpush1.msra.mxu0 0.0
    %887 = vmatprep.mubr.f32.mxu0 0.0
    %888 = vmatmul.mubr.f32.gmra.mrb[0].mxu0 %v784
    %v889 = vpop.f32.mrb[0].mxu0
    %v890 = vadd.f32 %v821, %v889
    %v891 = vpop.f32.mrb[0].mxu0
    %892 = vmatprep.mubr.f32.mxu0 0.0
    %893 = vmatmul.mubr.f32.gmra.mrb[0].mxu0 %v785
    %v894 = vpop.f32.mrb[0].mxu0
    %v895 = vadd.f32 %v821, %v894
    %v896 = vpop.f32.mrb[0].mxu0
    %897 = vmatprep.mubr.f32.mxu0 0.0
    %898 = vmatmul.mubr.f32.gmra.mrb[0].mxu0 %v786
    %v899 = vpop.f32.mrb[0].mxu0
    %v900 = vadd.f32 %v821, %v899
    %v901 = vpop.f32.mrb[0].mxu0
    %902 = vmatprep.mubr.f32.mxu0 0.0
    %903 = vmatmul.mubr.f32.gmra.mrb[0].mxu0 %v787
    %v904 = vpop.f32.mrb[0].mxu0
    %v905 = vadd.f32 %v821, %v904
    %v906 = vpop.f32.mrb[0].mxu0
    %907 = vmatprep.mubr.f32.mxu0 0.0
    %908 = vmatmul.mubr.f32.gmra.mrb[0].mxu0 %v788
    %v909 = vpop.f32.mrb[0].mxu0
    %v910 = vadd.f32 %v821, %v909
    %v911 = vpop.f32.mrb[0].mxu0
    %912 = vmatprep.mubr.f32.mxu0 0.0
    %913 = vmatmul.mubr.f32.gmra.mrb[0].mxu0 %v789
    %v914 = vpop.f32.mrb[0].mxu0
    %v915 = vadd.f32 %v821, %v914
    %v916 = vpop.f32.mrb[0].mxu0
    %917 = vmatprep.mubr.f32.mxu0 0.0
    %918 = vmatmul.mubr.f32.gmra.mrb[0].mxu0 %v790
    %v919 = vpop.f32.mrb[0].mxu0
    %v920 = vadd.f32 %v821, %v919
    %v921 = vpop.f32.mrb[0].mxu0
    %922 = vmatprep.mubr.f32.mxu0 0.0
    %923 = vmatmul.mubr.f32.gmra.mrb[0].mxu0 %v791
    %v924 = vpop.f32.mrb[0].mxu0
    %v925 = vadd.f32 %v821, %v924
    %v926 = vpop.f32.mrb[0].mxu0
    %927 = vmatprep.mubr.f32.mxu0 0.0
    %928 = vmatmul.mubr.f32.gmra.mrb[0].mxu0 %v792
    %v929 = vpop.f32.mrb[0].mxu0
    %v930 = vadd.f32 %v821, %v929
    %v931 = vpop.f32.mrb[0].mxu0
    %932 = vmatprep.mubr.f32.mxu0 0.0
    %933 = vmatmul.mubr.f32.gmra.mrb[0].mxu0 %v793
    %v934 = vpop.f32.mrb[0].mxu0
    %v935 = vadd.f32 %v821, %v934
    %v936 = vpop.f32.mrb[0].mxu0
    %937 = vmatprep.mubr.f32.mxu0 0.0
    %938 = vmatmul.mubr.f32.gmra.mrb[0].mxu0 %v794
    %v939 = vpop.f32.mrb[0].mxu0
    %v940 = vadd.f32 %v821, %v939
    %v941 = vpop.f32.mrb[0].mxu0
    %942 = vmatprep.mubr.f32.mxu0 0.0
    %943 = vmatmul.mubr.f32.gmra.mrb[0].mxu0 %v795
    %v944 = vpop.f32.mrb[0].mxu0
    %v945 = vadd.f32 %v821, %v944
    %v946 = vpop.f32.mrb[0].mxu0
    %947 = vmatprep.mubr.f32.mxu0 0.0
    %948 = vmatmul.mubr.f32.gmra.mrb[0].mxu0 %v796
    %v949 = vpop.f32.mrb[0].mxu0
    %v950 = vadd.f32 %v821, %v949
    %v951 = vpop.f32.mrb[0].mxu0
    %952 = vmatprep.mubr.f32.mxu0 0.0
    %953 = vmatmul.mubr.f32.gmra.mrb[0].mxu0 %v797
    %v954 = vpop.f32.mrb[0].mxu0
    %v955 = vadd.f32 %v821, %v954
    %v956 = vpop.f32.mrb[0].mxu0
    %957 = vmatprep.mubr.f32.mxu0 0.0
    %958 = vmatmul.mubr.f32.gmra.mrb[0].mxu0 %v798
    %v959 = vpop.f32.mrb[0].mxu0
    %v960 = vadd.f32 %v821, %v959
    %v961 = vpop.f32.mrb[0].mxu0
    %962 = vmatprep.mubr.f32.mxu0 0.0
    %963 = vmatmul.mubr.f32.gmra.mrb[0].mxu0 %v799
    %v964 = vpop.f32.mrb[0].mxu0
    %v965 = vadd.f32 %v821, %v964
    %v966 = vpop.f32.mrb[0].mxu0
    %967 = vdwg.mxu0
    %v968 = vmax.f32 %v890, 0.0
    %v969 = vmax.f32 %v895, 0.0
    %v970 = vmax.f32 %v900, 0.0
    %v971 = vmax.f32 %v905, 0.0
    %v972 = vmax.f32 %v910, 0.0
    %v973 = vmax.f32 %v915, 0.0
    %v974 = vmax.f32 %v920, 0.0
    %v975 = vmax.f32 %v925, 0.0
    %v976 = vmax.f32 %v930, 0.0
    %v977 = vmax.f32 %v935, 0.0
    %v978 = vmax.f32 %v940, 0.0
    %v979 = vmax.f32 %v945, 0.0
    %v980 = vmax.f32 %v950, 0.0
    %v981 = vmax.f32 %v955, 0.0
    %v982 = vmax.f32 %v960, 0.0
    %v983 = vmax.f32 %v965, 0.0
    %v984 = vld [vmem:[%s7] sm:$0x1]
    %v985 = vld [vmem:[#allocation2] sm:$0x1]
    %987 = vset.pattern.permute.xlu0 0
    %988 = vperm.xlu0 %987, %v985
    %v989 = vpop.permute.xlu0 %988
    %v991 = vlaneseq
    %v992 = vshrl.u32 %v991, 7
    %v993 = vsub.s32 0, %v992
    %v994 = vrot.slane %v989, %v993
    %995 = vmatprep.subr.mxu0 0.0
    %996 = vmatpush1.xpose.msra.mxu0 %v968
    %997 = vmatprep.subr.mxu0 0.0
    %998 = vmatpush1.xpose.msra.mxu0 %v969
    %999 = vmatprep.subr.mxu0 0.0
    %1000 = vmatpush1.xpose.msra.mxu0 %v970
    %1001 = vmatprep.subr.mxu0 0.0
    %1002 = vmatpush1.xpose.msra.mxu0 %v971
    %1003 = vmatprep.subr.mxu0 0.0
    %1004 = vmatpush1.xpose.msra.mxu0 %v972
    %1005 = vmatprep.subr.mxu0 0.0
    %1006 = vmatpush1.xpose.msra.mxu0 %v973
    %1007 = vmatprep.subr.mxu0 0.0
    %1008 = vmatpush1.xpose.msra.mxu0 %v974
    %1009 = vmatprep.subr.mxu0 0.0
    %1010 = vmatpush1.xpose.msra.mxu0 %v975
    %1011 = vmatprep.subr.mxu0 0.0
    %1012 = vmatpush1.xpose.msra.mxu0 %v976
    %1013 = vmatprep.subr.mxu0 0.0
    %1014 = vmatpush1.xpose.msra.mxu0 %v977
    %1015 = vmatprep.subr.mxu0 0.0
    %1016 = vmatpush1.xpose.msra.mxu0 %v978
    %1017 = vmatprep.subr.mxu0 0.0
    %1018 = vmatpush1.xpose.msra.mxu0 %v979
    %1019 = vmatprep.subr.mxu0 0.0
    %1020 = vmatpush1.xpose.msra.mxu0 %v980
    %1021 = vmatprep.subr.mxu0 0.0
    %1022 = vmatpush1.xpose.msra.mxu0 %v981
    %1023 = vmatprep.subr.mxu0 0.0
    %1024 = vmatpush1.xpose.msra.mxu0 %v982
    %1025 = vmatprep.subr.mxu0 0.0
    %1026 = vmatpush1.xpose.msra.mxu0 %v983
    %1027 = vmatprep.subr.mxu0 0.0
    %1028 = vmatpush1.xpose.msra.mxu0 0.0
    %1029 = vmatprep.subr.mxu0 0.0
    %1030 = vmatpush1.xpose.msra.mxu0 0.0
    %1031 = vmatprep.subr.mxu0 0.0
    %1032 = vmatpush1.xpose.msra.mxu0 0.0
    %1033 = vmatprep.subr.mxu0 0.0
    %1034 = vmatpush1.xpose.msra.mxu0 0.0
    %1035 = vmatprep.subr.mxu0 0.0
    %1036 = vmatpush1.xpose.msra.mxu0 0.0
    %1037 = vmatprep.subr.mxu0 0.0
    %1038 = vmatpush1.xpose.msra.mxu0 0.0
    %1039 = vmatprep.subr.mxu0 0.0
    %1040 = vmatpush1.xpose.msra.mxu0 0.0
    %1041 = vmatprep.subr.mxu0 0.0
    %1042 = vmatpush1.xpose.msra.mxu0 0.0
    %1043 = vmatprep.subr.mxu0 0.0
    %1044 = vmatpush1.xpose.msra.mxu0 0.0
    %1045 = vmatprep.subr.mxu0 0.0
    %1046 = vmatpush1.xpose.msra.mxu0 0.0
    %1047 = vmatprep.subr.mxu0 0.0
    %1048 = vmatpush1.xpose.msra.mxu0 0.0
    %1049 = vmatprep.subr.mxu0 0.0
    %1050 = vmatpush1.xpose.msra.mxu0 0.0
    %1051 = vmatprep.subr.mxu0 0.0
    %1052 = vmatpush1.xpose.msra.mxu0 0.0
    %1053 = vmatprep.subr.mxu0 0.0
    %1054 = vmatpush1.xpose.msra.mxu0 0.0
    %1055 = vmatprep.subr.mxu0 0.0
    %1056 = vmatpush1.xpose.msra.mxu0 0.0
    %1057 = vmatprep.subr.mxu0 0.0
    %1058 = vmatpush1.xpose.msra.mxu0 0.0
    %1059 = vmatprep.mubr.f32.mxu0 0.0
    %1060 = vmatmul.mubr.f32.gmra.mrb[0].mxu0 %v984
    %v1061 = vpop.f32.mrb[0].mxu0
    %v1062 = vadd.f32 %v994, %v1061
    %v1063 = vpop.f32.mrb[0].mxu0
    %1064 = vdwg.mxu0
    %1065 = vst [vmem:[#allocation11] sm:$0x1] %v1062
    // Predicated region
    $region54: #{tpu_custom_call.1} parent=1 // pred_check
      _
    $region55: #{tpu_custom_call.1} parent=1 // pred_check_branch
      %1067 = sbr.rel (0) target = $region57
    $region56: #{tpu_custom_call.1} parent=1 // pred_region
      %s1069 = ssub.s32 16, 16
      %1070 = vsyncadd [#allocation5], %s1069
      %s1072 = sshll.u32 [#allocation11], 4
      %s1073 = int_to_ptr.vmem [resolvable:$true] %s1072
      %1075 = dma.vmem_to_hbm [thread:$0]  %s1073, 16, %s9, [#allocation5]
    $region57: #{tpu_custom_call.1} parent=1 // pred_fallthru
      _
    // Predicated region
    $region58: #{tpu_custom_call.1} parent=1 // pred_check
      _
    $region59: #{tpu_custom_call.1} parent=1 // pred_check_branch
      %1077 = sbr.rel (0) target = $region61
    $region60: #{tpu_custom_call.1} parent=1 // pred_region
      %1078 = dma.done [#allocation5], 16
    $region61: #{tpu_custom_call.1} parent=1 // pred_fallthru
      _
    %1079 = vsyncpa [#allocation4], 1
    %1080 = vsyncpa [#allocation7], 1
    %1081 = vsyncpa [#allocation10], 1
    %1082 = vsyncpa [#allocation5], 1

</llo_original>
